<compile_context>
chip_gen: v7x
topology: tpu7x:2x2x1
jax: 0.10.0
libtpu: 0.0.40
codegen_flags: <defaults>
</compile_context>

<pallas_src>
import jax
import jax.numpy as jnp
from jax import lax
from jax.experimental import pallas as pl
from jax.experimental.pallas import tpu as pltpu

LANE = 128  # TPU lane width


def qnetwork_kernel(x_ref,
                    w1_ref, b1_ref,
                    w2_ref, b2_ref,
                    w3_ref, b3_ref,
                    w4_ref, b4_ref,
                    w5_ref, b5_ref,
                    o_ref):
    # Layouts:
    #   x_ref : (tile_b, C_in)   natural batch-major block (no wrapper transpose)
    #   w*    : (out, in)        torch nn.Linear native weight layout
    #   b*    : (out, 1)         f32, broadcast along the lane (batch) axis
    #   o_ref : (C_out, tile_b)  lane-dense output block
    cd = w1_ref.dtype                       # compute dtype (f32 or bf16 weights)
    x_blk = x_ref[...].astype(cd)           # (tile_b, C_in)

    # First layer: contract W1's "in" axis against x's feature axis directly
    # from the (batch, feature) layout -> (out, tile_b), already lane-dense.
    h = lax.dot_general(w1_ref[...], x_blk, (((1,), (1,)), ((), ())),
                        preferred_element_type=jnp.float32)
    h = jnp.maximum(h + b1_ref[...], 0.0)

    h = jnp.dot(w2_ref[...], h.astype(cd), preferred_element_type=jnp.float32)
    h = jnp.maximum(h + b2_ref[...], 0.0)
    h = jnp.dot(w3_ref[...], h.astype(cd), preferred_element_type=jnp.float32)
    h = jnp.maximum(h + b3_ref[...], 0.0)
    h = jnp.dot(w4_ref[...], h.astype(cd), preferred_element_type=jnp.float32)
    h = jnp.maximum(h + b4_ref[...], 0.0)
    out = jnp.dot(w5_ref[...], h.astype(cd),
                  preferred_element_type=jnp.float32) + b5_ref[...]
    o_ref[...] = out.astype(o_ref.dtype)


def _choose_batch_tile(B, desired_tile):
    """Pick (tile_b, B_pad): tile multiple of 128, >=2 grid steps when B allows
    (v7x megacore sharding; free on single-TC v5e/v6e), <~10% padding waste."""
    B128 = pl.cdiv(B, LANE) * LANE
    if B128 <= LANE:
        return LANE, LANE
    desired = max(LANE, (min(int(desired_tile), B128) // LANE) * LANE)
    if B128 >= 2 * LANE:
        desired = min(desired, pl.cdiv(B128 // 2, LANE) * LANE)
    max_waste = max(LANE, B128 // 10)
    for t in range(desired, LANE - 1, -LANE):
        B_pad = pl.cdiv(B128, t) * t
        if (B_pad - B128 <= max_waste) or t == LANE:
            return t, B_pad
    return LANE, B128


def _vmem_limit_bytes(tile_b, C_in, C_out, inner, param_bytes, x_itemsize):
    """Raise the scoped-VMEM limit only when the estimate exceeds v5e's 16 MiB
    default; cap well under v7x's 64 MiB physical VMEM."""
    est = (3 * inner * tile_b * 4            # live (inner, tile_b) f32 temps
           + 2 * tile_b * C_in * x_itemsize  # double-buffered x blocks
           + 2 * C_out * tile_b * 4          # double-buffered out blocks
           + 2 * param_bytes)                # resident (double-buffered) params
    if est <= 14 * (1 << 20):
        return None
    return min(int(est * 1.5), 48 * (1 << 20))


def qnetwork_forward(x, params, *, tile_b=4096, compute_dtype=None,
                     transposed_output=False):
    """x: (B, C_in) float32; params: list of (W, b), W (out, in), b (out, 1).

    Equivalent to torch: x -> Linear/ReLU x4 -> Linear.
    Returns (B, C_out), or the raw lane-dense (C_out, B_pad) kernel output if
    transposed_output=True (preferred for fused consumers; padded columns past
    B contain garbage and must not be read).
    compute_dtype=jnp.bfloat16 enables single-pass bf16 MXU on v6e/v7x
    (relax tolerances to ~1e-2 if comparing against an f32 reference).
    """
    B, C_in = x.shape
    C_out = params[-1][0].shape[0]
    inner = params[0][0].shape[0]

    tile_b, B_pad = _choose_batch_tile(B, tile_b)
    if B_pad != B:
        x = jnp.pad(x, ((0, B_pad - B), (0, 0)))   # zero rows, sliced off below

    # Flatten params: W1, b1, ..., W5, b5. Full-array blocks with constant
    # index_maps -> weights stay resident in VMEM across all grid steps.
    flat = []
    weight_specs = []
    param_bytes = 0
    for w, b in params:
        if compute_dtype is not None:
            w = w.astype(compute_dtype)
        flat.extend([w, b])                         # biases stay f32
        weight_specs.append(pl.BlockSpec(w.shape, lambda i: (0, 0)))
        weight_specs.append(pl.BlockSpec(b.shape, lambda i: (0, 0)))
        param_bytes += w.size * w.dtype.itemsize + b.size * b.dtype.itemsize

    vlim = _vmem_limit_bytes(tile_b, C_in, C_out, inner, param_bytes,
                             x.dtype.itemsize)

    grid = (B_pad // tile_b,)
    out_t = pl.pallas_call(
        qnetwork_kernel,
        out_shape=jax.ShapeDtypeStruct((C_out, B_pad), jnp.float32),
        grid_spec=pltpu.PrefetchScalarGridSpec(
            num_scalar_prefetch=0,
            grid=grid,
            in_specs=[pl.BlockSpec((tile_b, C_in), lambda i: (i, 0))]
                     + weight_specs,
            out_specs=pl.BlockSpec((C_out, tile_b), lambda i: (0, i)),
        ),
        compiler_params=pltpu.CompilerParams(
            dimension_semantics=("parallel",),
            vmem_limit_bytes=vlim),
    )(x, *flat)

    if transposed_output:
        return out_t                      # (C_out, B_pad), lane-dense
    return out_t.T[:B]                    # (B, C_out), torch semantics


def init_params(key, input_channels, output_channels, inner_channels=64,
                inner_layers=3):
    """Deterministic init mimicking the Qnetwork layer stack.

    Weights stored in torch-native (out, in) layout, biases as (out, 1).
    """
    dims = ([input_channels] + [inner_channels] * (inner_layers + 1)
            + [output_channels])
    params = []
    for din, dout in zip(dims[:-1], dims[1:]):
        key, kw, kb = jax.random.split(key, 3)
        bound = 1.0 / jnp.sqrt(jnp.float32(din))
        w = jax.random.uniform(kw, (dout, din), jnp.float32, -bound, bound)
        b = jax.random.uniform(kb, (dout, 1), jnp.float32, -bound, bound)
        params.append((w, b))
    return params


def reference_forward(x, params):
    h = x
    n = len(params)
    for i, (w, b) in enumerate(params):
        h = h @ w.T + b.reshape(1, -1)
        if i < n - 1:
            h = jnp.maximum(h, 0.0)
    return h


if __name__ == "__main__":
    input_channels = 4
    output_channels = 2
    inner_channels = 64
    inner_layers = 3
    batch = 16

    key = jax.random.PRNGKey(0)
    key, kx = jax.random.split(key)
    x = jax.random.normal(kx, (batch, input_channels), jnp.float32)
    params = init_params(key, input_channels, output_channels,
                         inner_channels, inner_layers)

    out = qnetwork_forward(x, params)          # f32 demo path (1e-4 tolerance)
    out = jax.block_until_ready(out)

    ref = reference_forward(x, params)
    assert out.shape == (batch, output_channels)
    assert jnp.allclose(out, ref, atol=1e-4, rtol=1e-4), "mismatch vs reference"

    print("KERNEL_OK")
</pallas_src>

<mosaic_0001>
module attributes {stable_mosaic.version = 11 : i64} {
  func.func @qnetwork_kernel(%arg0: i32, %arg1: memref<128x4xf32, #tpu.memory_space<vmem>>, %arg2: memref<64x4xf32, #tpu.memory_space<vmem>>, %arg3: memref<64x1xf32, #tpu.memory_space<vmem>>, %arg4: memref<64x64xf32, #tpu.memory_space<vmem>>, %arg5: memref<64x1xf32, #tpu.memory_space<vmem>>, %arg6: memref<64x64xf32, #tpu.memory_space<vmem>>, %arg7: memref<64x1xf32, #tpu.memory_space<vmem>>, %arg8: memref<64x64xf32, #tpu.memory_space<vmem>>, %arg9: memref<64x1xf32, #tpu.memory_space<vmem>>, %arg10: memref<2x64xf32, #tpu.memory_space<vmem>>, %arg11: memref<2x1xf32, #tpu.memory_space<vmem>>, %arg12: memref<2x128xf32, #tpu.memory_space<vmem>>) attributes {dimension_semantics = [#tpu.dimension_semantics<parallel>], iteration_bounds = array<i64: 1>, scalar_prefetch = 0 : i64, scratch_operands = 0 : i64, tpu.core_type = #tpu.core_type<tc>, window_params = [{transform_indices = @transform_0, window_bounds = array<i64: 128, 4>}, {pipeline_mode = #tpu.pipeline_mode<synchronous>, transform_indices = @transform_1, window_bounds = array<i64: 64, 4>}, {pipeline_mode = #tpu.pipeline_mode<synchronous>, transform_indices = @transform_2, window_bounds = array<i64: 64, 1>}, {pipeline_mode = #tpu.pipeline_mode<synchronous>, transform_indices = @transform_3, window_bounds = array<i64: 64, 64>}, {pipeline_mode = #tpu.pipeline_mode<synchronous>, transform_indices = @transform_4, window_bounds = array<i64: 64, 1>}, {pipeline_mode = #tpu.pipeline_mode<synchronous>, transform_indices = @transform_5, window_bounds = array<i64: 64, 64>}, {pipeline_mode = #tpu.pipeline_mode<synchronous>, transform_indices = @transform_6, window_bounds = array<i64: 64, 1>}, {pipeline_mode = #tpu.pipeline_mode<synchronous>, transform_indices = @transform_7, window_bounds = array<i64: 64, 64>}, {pipeline_mode = #tpu.pipeline_mode<synchronous>, transform_indices = @transform_8, window_bounds = array<i64: 64, 1>}, {pipeline_mode = #tpu.pipeline_mode<synchronous>, transform_indices = @transform_9, window_bounds = array<i64: 2, 64>}, {pipeline_mode = #tpu.pipeline_mode<synchronous>, transform_indices = @transform_10, window_bounds = array<i64: 2, 1>}, {transform_indices = @transform_11, window_bounds = array<i64: 2, 128>}]} {
    %c0 = arith.constant 0 : index
    %c0_0 = arith.constant 0 : index
    %0 = vector.load %arg1[%c0, %c0_0] : memref<128x4xf32, #tpu.memory_space<vmem>>, vector<128x4xf32>
    %c0_1 = arith.constant 0 : index
    %c0_2 = arith.constant 0 : index
    %1 = vector.load %arg2[%c0_1, %c0_2] : memref<64x4xf32, #tpu.memory_space<vmem>>, vector<64x4xf32>
    %cst = arith.constant dense<0.000000e+00> : vector<64x128xf32>
    %2 = tpu.matmul %1, %0, %cst {dimension_numbers = #tpu.dot_dimension_numbers<[1], [1], [0], [0], [0, 0, 1, 0], [], []>} : vector<64x4xf32>, vector<128x4xf32>, vector<64x128xf32> -> vector<64x128xf32>
    %c0_3 = arith.constant 0 : index
    %c0_4 = arith.constant 0 : index
    %3 = vector.load %arg3[%c0_3, %c0_4] : memref<64x1xf32, #tpu.memory_space<vmem>>, vector<64x1xf32>
    %4 = vector.broadcast %3 : vector<64x1xf32> to vector<64x128xf32>
    %5 = arith.addf %2, %4 : vector<64x128xf32>
    %cst_5 = arith.constant 0.000000e+00 : f32
    %6 = vector.broadcast %cst_5 : f32 to vector<64x128xf32>
    %7 = arith.maximumf %5, %6 : vector<64x128xf32>
    %c0_6 = arith.constant 0 : index
    %c0_7 = arith.constant 0 : index
    %8 = vector.load %arg4[%c0_6, %c0_7] : memref<64x64xf32, #tpu.memory_space<vmem>>, vector<64x64xf32>
    %cst_8 = arith.constant dense<0.000000e+00> : vector<64x128xf32>
    %9 = tpu.matmul %8, %7, %cst_8 {dimension_numbers = #tpu.dot_dimension_numbers<[1], [0], [0], [1], [0, 0, 1, 1], [], []>} : vector<64x64xf32>, vector<64x128xf32>, vector<64x128xf32> -> vector<64x128xf32>
    %c0_9 = arith.constant 0 : index
    %c0_10 = arith.constant 0 : index
    %10 = vector.load %arg5[%c0_9, %c0_10] : memref<64x1xf32, #tpu.memory_space<vmem>>, vector<64x1xf32>
    %11 = vector.broadcast %10 : vector<64x1xf32> to vector<64x128xf32>
    %12 = arith.addf %9, %11 : vector<64x128xf32>
    %cst_11 = arith.constant 0.000000e+00 : f32
    %13 = vector.broadcast %cst_11 : f32 to vector<64x128xf32>
    %14 = arith.maximumf %12, %13 : vector<64x128xf32>
    %c0_12 = arith.constant 0 : index
    %c0_13 = arith.constant 0 : index
    %15 = vector.load %arg6[%c0_12, %c0_13] : memref<64x64xf32, #tpu.memory_space<vmem>>, vector<64x64xf32>
    %cst_14 = arith.constant dense<0.000000e+00> : vector<64x128xf32>
    %16 = tpu.matmul %15, %14, %cst_14 {dimension_numbers = #tpu.dot_dimension_numbers<[1], [0], [0], [1], [0, 0, 1, 1], [], []>} : vector<64x64xf32>, vector<64x128xf32>, vector<64x128xf32> -> vector<64x128xf32>
    %c0_15 = arith.constant 0 : index
    %c0_16 = arith.constant 0 : index
    %17 = vector.load %arg7[%c0_15, %c0_16] : memref<64x1xf32, #tpu.memory_space<vmem>>, vector<64x1xf32>
    %18 = vector.broadcast %17 : vector<64x1xf32> to vector<64x128xf32>
    %19 = arith.addf %16, %18 : vector<64x128xf32>
    %cst_17 = arith.constant 0.000000e+00 : f32
    %20 = vector.broadcast %cst_17 : f32 to vector<64x128xf32>
    %21 = arith.maximumf %19, %20 : vector<64x128xf32>
    %c0_18 = arith.constant 0 : index
    %c0_19 = arith.constant 0 : index
    %22 = vector.load %arg8[%c0_18, %c0_19] : memref<64x64xf32, #tpu.memory_space<vmem>>, vector<64x64xf32>
    %cst_20 = arith.constant dense<0.000000e+00> : vector<64x128xf32>
    %23 = tpu.matmul %22, %21, %cst_20 {dimension_numbers = #tpu.dot_dimension_numbers<[1], [0], [0], [1], [0, 0, 1, 1], [], []>} : vector<64x64xf32>, vector<64x128xf32>, vector<64x128xf32> -> vector<64x128xf32>
    %c0_21 = arith.constant 0 : index
    %c0_22 = arith.constant 0 : index
    %24 = vector.load %arg9[%c0_21, %c0_22] : memref<64x1xf32, #tpu.memory_space<vmem>>, vector<64x1xf32>
    %25 = vector.broadcast %24 : vector<64x1xf32> to vector<64x128xf32>
    %26 = arith.addf %23, %25 : vector<64x128xf32>
    %cst_23 = arith.constant 0.000000e+00 : f32
    %27 = vector.broadcast %cst_23 : f32 to vector<64x128xf32>
    %28 = arith.maximumf %26, %27 : vector<64x128xf32>
    %c0_24 = arith.constant 0 : index
    %c0_25 = arith.constant 0 : index
    %29 = vector.load %arg10[%c0_24, %c0_25] : memref<2x64xf32, #tpu.memory_space<vmem>>, vector<2x64xf32>
    %cst_26 = arith.constant dense<0.000000e+00> : vector<2x128xf32>
    %30 = tpu.matmul %29, %28, %cst_26 {dimension_numbers = #tpu.dot_dimension_numbers<[1], [0], [0], [1], [0, 0, 1, 1], [], []>} : vector<2x64xf32>, vector<64x128xf32>, vector<2x128xf32> -> vector<2x128xf32>
    %c0_27 = arith.constant 0 : index
    %c0_28 = arith.constant 0 : index
    %31 = vector.load %arg11[%c0_27, %c0_28] : memref<2x1xf32, #tpu.memory_space<vmem>>, vector<2x1xf32>
    %32 = vector.broadcast %31 : vector<2x1xf32> to vector<2x128xf32>
    %33 = arith.addf %30, %32 : vector<2x128xf32>
    %c0_29 = arith.constant 0 : index
    %c0_30 = arith.constant 0 : index
    %34 = vector.load %arg12[%c0_29, %c0_30] : memref<2x128xf32, #tpu.memory_space<vmem>>, vector<2x128xf32>
    tpu.vector_store %arg12[%c0_29, %c0_30], %33 {strides = array<i32>} : memref<2x128xf32, #tpu.memory_space<vmem>>, vector<2x128xf32>,
    return
  }
  func.func @transform_0(%arg0: i32) -> (i32, i32) {
    %c0_i32 = arith.constant 0 : i32
    %c0_i32_0 = arith.constant 0 : i32
    return %arg0, %c0_i32 : i32, i32
  }
  func.func @transform_1(%arg0: i32) -> (i32, i32) {
    %c0_i32 = arith.constant 0 : i32
    %c0_i32_0 = arith.constant 0 : i32
    %c0_i32_1 = arith.constant 0 : i32
    return %c0_i32, %c0_i32_0 : i32, i32
  }
  func.func @transform_2(%arg0: i32) -> (i32, i32) {
    %c0_i32 = arith.constant 0 : i32
    %c0_i32_0 = arith.constant 0 : i32
    %c0_i32_1 = arith.constant 0 : i32
    return %c0_i32, %c0_i32_0 : i32, i32
  }
  func.func @transform_3(%arg0: i32) -> (i32, i32) {
    %c0_i32 = arith.constant 0 : i32
    %c0_i32_0 = arith.constant 0 : i32
    %c0_i32_1 = arith.constant 0 : i32
    return %c0_i32, %c0_i32_0 : i32, i32
  }
  func.func @transform_4(%arg0: i32) -> (i32, i32) {
    %c0_i32 = arith.constant 0 : i32
    %c0_i32_0 = arith.constant 0 : i32
    %c0_i32_1 = arith.constant 0 : i32
    return %c0_i32, %c0_i32_0 : i32, i32
  }
  func.func @transform_5(%arg0: i32) -> (i32, i32) {
    %c0_i32 = arith.constant 0 : i32
    %c0_i32_0 = arith.constant 0 : i32
    %c0_i32_1 = arith.constant 0 : i32
    return %c0_i32, %c0_i32_0 : i32, i32
  }
  func.func @transform_6(%arg0: i32) -> (i32, i32) {
    %c0_i32 = arith.constant 0 : i32
    %c0_i32_0 = arith.constant 0 : i32
    %c0_i32_1 = arith.constant 0 : i32
    return %c0_i32, %c0_i32_0 : i32, i32
  }
  func.func @transform_7(%arg0: i32) -> (i32, i32) {
    %c0_i32 = arith.constant 0 : i32
    %c0_i32_0 = arith.constant 0 : i32
    %c0_i32_1 = arith.constant 0 : i32
    return %c0_i32, %c0_i32_0 : i32, i32
  }
  func.func @transform_8(%arg0: i32) -> (i32, i32) {
    %c0_i32 = arith.constant 0 : i32
    %c0_i32_0 = arith.constant 0 : i32
    %c0_i32_1 = arith.constant 0 : i32
    return %c0_i32, %c0_i32_0 : i32, i32
  }
  func.func @transform_9(%arg0: i32) -> (i32, i32) {
    %c0_i32 = arith.constant 0 : i32
    %c0_i32_0 = arith.constant 0 : i32
    %c0_i32_1 = arith.constant 0 : i32
    return %c0_i32, %c0_i32_0 : i32, i32
  }
  func.func @transform_10(%arg0: i32) -> (i32, i32) {
    %c0_i32 = arith.constant 0 : i32
    %c0_i32_0 = arith.constant 0 : i32
    %c0_i32_1 = arith.constant 0 : i32
    return %c0_i32, %c0_i32_0 : i32, i32
  }
  func.func @transform_11(%arg0: i32) -> (i32, i32) {
    %c0_i32 = arith.constant 0 : i32
    %c0_i32_0 = arith.constant 0 : i32
    return %c0_i32, %arg0 : i32, i32
  }
}

</mosaic_0001>

<llo_original>
// kernel: tpu_custom_call.1
$region0: #{tpu_custom_call.1}
  #allocation0 [shape = 'u32[]', space=smem, size = 0x4, offset = 0x4, fixed_abs, tag = 'smem constant byte address 0x4 - core index']
  #allocation1 [shape = 'u32[144,128]{1,0:T(1,128)}', space=vmem, size = 0x12000, scoped, tag = 'internal scratch']
  %s0 = inlined_call_operand.vmem [shape: f32[128,4], index: 0, kind: input, shape index: {}]
  %s1 = inlined_call_operand.vmem [shape: f32[64,4], index: 1, kind: input, shape index: {}]
  %s2 = inlined_call_operand.vmem [shape: f32[64,1], index: 2, kind: input, shape index: {}]
  %s3 = inlined_call_operand.vmem [shape: f32[64,64], index: 3, kind: input, shape index: {}]
  %s4 = inlined_call_operand.vmem [shape: f32[64,1], index: 4, kind: input, shape index: {}]
  %s5 = inlined_call_operand.vmem [shape: f32[64,64], index: 5, kind: input, shape index: {}]
  %s6 = inlined_call_operand.vmem [shape: f32[64,1], index: 6, kind: input, shape index: {}]
  %s7 = inlined_call_operand.vmem [shape: f32[64,64], index: 7, kind: input, shape index: {}]
  %s8 = inlined_call_operand.vmem [shape: f32[64,1], index: 8, kind: input, shape index: {}]
  %s9 = inlined_call_operand.vmem [shape: f32[2,64], index: 9, kind: input, shape index: {}]
  %s10 = inlined_call_operand.vmem [shape: f32[2,1], index: 10, kind: input, shape index: {}]
  %s11 = inlined_call_operand.hbm [shape: f32[2,128], index: 11, kind: output, shape index: {}]
  %s12 = sld [smem:[#allocation0]]
  $region54: #{tpu_custom_call.1} parent=0
    _
  %s14 = ssub.s32 1, %s12
  %s15 = scalar_select 0, %s14, %s12
  $region1: #{tpu_custom_call.1} parent=0
    #allocation2 [shape = 'u8[1024]{0}', space=vmem, size = 0x400, scoped, tag = 'output window, operand 0, single buffered']
    #allocation3 [shape = 's32[1]{0}', space=sflag, size = 0x4, scoped, tag = 'scoped memory for tpu_custom_call.1']
    %16 = vsyncpa [#allocation3], 0
    // Predicated region
    $region2: #{tpu_custom_call.1} parent=1 // pred_check
      _
    $region3: #{tpu_custom_call.1} parent=1 // pred_check_branch
      %18 = sbr.rel (0) target = $region5
    $region4: #{tpu_custom_call.1} parent=1 // pred_region
      _
    $region5: #{tpu_custom_call.1} parent=1 // pred_fallthru
      _
    // Predicated region
    $region6: #{tpu_custom_call.1} parent=1 // pred_check
      _
    $region7: #{tpu_custom_call.1} parent=1 // pred_check_branch
      %20 = sbr.rel (0) target = $region9
    $region8: #{tpu_custom_call.1} parent=1 // pred_region
      _
    $region9: #{tpu_custom_call.1} parent=1 // pred_fallthru
      _
    // Predicated region
    $region10: #{tpu_custom_call.1} parent=1 // pred_check
      _
    $region11: #{tpu_custom_call.1} parent=1 // pred_check_branch
      %22 = sbr.rel (0) target = $region13
    $region12: #{tpu_custom_call.1} parent=1 // pred_region
      _
    $region13: #{tpu_custom_call.1} parent=1 // pred_fallthru
      _
    // Predicated region
    $region14: #{tpu_custom_call.1} parent=1 // pred_check
      _
    $region15: #{tpu_custom_call.1} parent=1 // pred_check_branch
      %24 = sbr.rel (0) target = $region17
    $region16: #{tpu_custom_call.1} parent=1 // pred_region
      _
    $region17: #{tpu_custom_call.1} parent=1 // pred_fallthru
      _
    // Predicated region
    $region18: #{tpu_custom_call.1} parent=1 // pred_check
      _
    $region19: #{tpu_custom_call.1} parent=1 // pred_check_branch
      %26 = sbr.rel (0) target = $region21
    $region20: #{tpu_custom_call.1} parent=1 // pred_region
      _
    $region21: #{tpu_custom_call.1} parent=1 // pred_fallthru
      _
    // Predicated region
    $region22: #{tpu_custom_call.1} parent=1 // pred_check
      _
    $region23: #{tpu_custom_call.1} parent=1 // pred_check_branch
      %28 = sbr.rel (0) target = $region25
    $region24: #{tpu_custom_call.1} parent=1 // pred_region
      _
    $region25: #{tpu_custom_call.1} parent=1 // pred_fallthru
      _
    // Predicated region
    $region26: #{tpu_custom_call.1} parent=1 // pred_check
      _
    $region27: #{tpu_custom_call.1} parent=1 // pred_check_branch
      %30 = sbr.rel (0) target = $region29
    $region28: #{tpu_custom_call.1} parent=1 // pred_region
      _
    $region29: #{tpu_custom_call.1} parent=1 // pred_fallthru
      _
    // Predicated region
    $region30: #{tpu_custom_call.1} parent=1 // pred_check
      _
    $region31: #{tpu_custom_call.1} parent=1 // pred_check_branch
      %32 = sbr.rel (0) target = $region33
    $region32: #{tpu_custom_call.1} parent=1 // pred_region
      _
    $region33: #{tpu_custom_call.1} parent=1 // pred_fallthru
      _
    // Predicated region
    $region34: #{tpu_custom_call.1} parent=1 // pred_check
      _
    $region35: #{tpu_custom_call.1} parent=1 // pred_check_branch
      %34 = sbr.rel (0) target = $region37
    $region36: #{tpu_custom_call.1} parent=1 // pred_region
      _
    $region37: #{tpu_custom_call.1} parent=1 // pred_fallthru
      _
    // Predicated region
    $region38: #{tpu_custom_call.1} parent=1 // pred_check
      _
    $region39: #{tpu_custom_call.1} parent=1 // pred_check_branch
      %36 = sbr.rel (0) target = $region41
    $region40: #{tpu_custom_call.1} parent=1 // pred_region
      _
    $region41: #{tpu_custom_call.1} parent=1 // pred_fallthru
      _
    // Predicated region
    $region42: #{tpu_custom_call.1} parent=1 // pred_check
      _
    $region43: #{tpu_custom_call.1} parent=1 // pred_check_branch
      %38 = sbr.rel (0) target = $region45
    $region44: #{tpu_custom_call.1} parent=1 // pred_region
      _
    $region45: #{tpu_custom_call.1} parent=1 // pred_fallthru
      _
    %v39 = vld [vmem:[%s0] sm:$0xff]
    %v40 = vld [vmem:[%s0 + $0x8] sm:$0xff]
    %v41 = vld [vmem:[%s0 + $0x10] sm:$0xff]
    %v42 = vld [vmem:[%s0 + $0x18] sm:$0xff]
    %v43 = vld [vmem:[%s0 + $0x20] sm:$0xff]
    %v44 = vld [vmem:[%s0 + $0x28] sm:$0xff]
    %v45 = vld [vmem:[%s0 + $0x30] sm:$0xff]
    %v46 = vld [vmem:[%s0 + $0x38] sm:$0xff]
    %v47 = vld [vmem:[%s0 + $0x40] sm:$0xff]
    %v48 = vld [vmem:[%s0 + $0x48] sm:$0xff]
    %v49 = vld [vmem:[%s0 + $0x50] sm:$0xff]
    %v50 = vld [vmem:[%s0 + $0x58] sm:$0xff]
    %v51 = vld [vmem:[%s0 + $0x60] sm:$0xff]
    %v52 = vld [vmem:[%s0 + $0x68] sm:$0xff]
    %v53 = vld [vmem:[%s0 + $0x70] sm:$0xff]
    %v54 = vld [vmem:[%s0 + $0x78] sm:$0xff]
    %v55 = vld [vmem:[%s1] sm:$0xff]
    %v56 = vld [vmem:[%s1 + $0x8] sm:$0xff]
    %v57 = vld [vmem:[%s1 + $0x10] sm:$0xff]
    %v58 = vld [vmem:[%s1 + $0x18] sm:$0xff]
    %v59 = vld [vmem:[%s1 + $0x20] sm:$0xff]
    %v60 = vld [vmem:[%s1 + $0x28] sm:$0xff]
    %v61 = vld [vmem:[%s1 + $0x30] sm:$0xff]
    %v62 = vld [vmem:[%s1 + $0x38] sm:$0xff]
    %v63 = vld [vmem:[%s2] sm:$0xff]
    %v64 = vld [vmem:[%s2 + $0x8] sm:$0xff]
    %v65 = vld [vmem:[%s2 + $0x10] sm:$0xff]
    %v66 = vld [vmem:[%s2 + $0x18] sm:$0xff]
    %v67 = vld [vmem:[%s2 + $0x20] sm:$0xff]
    %v68 = vld [vmem:[%s2 + $0x28] sm:$0xff]
    %v69 = vld [vmem:[%s2 + $0x30] sm:$0xff]
    %v70 = vld [vmem:[%s2 + $0x38] sm:$0xff]
    %72 = vset.pattern.permute.xlu0 0
    %73 = vperm.xlu0 %72, %v63
    %v74 = vpop.permute.xlu0 %73
    %77 = vset.pattern.permute.xlu0 0
    %78 = vperm.xlu0 %77, %v64
    %v79 = vpop.permute.xlu0 %78
    %82 = vset.pattern.permute.xlu0 0
    %83 = vperm.xlu0 %82, %v65
    %v84 = vpop.permute.xlu0 %83
    %87 = vset.pattern.permute.xlu0 0
    %88 = vperm.xlu0 %87, %v66
    %v89 = vpop.permute.xlu0 %88
    %92 = vset.pattern.permute.xlu0 0
    %93 = vperm.xlu0 %92, %v67
    %v94 = vpop.permute.xlu0 %93
    %97 = vset.pattern.permute.xlu0 0
    %98 = vperm.xlu0 %97, %v68
    %v99 = vpop.permute.xlu0 %98
    %102 = vset.pattern.permute.xlu0 0
    %103 = vperm.xlu0 %102, %v69
    %v104 = vpop.permute.xlu0 %103
    %107 = vset.pattern.permute.xlu0 0
    %108 = vperm.xlu0 %107, %v70
    %v109 = vpop.permute.xlu0 %108
    %vm111 = vcmask 31744
    %v113 = vsel %vm111, %v55, 0
    %v116 = vsel %vm111, %v56, 0
    %v119 = vsel %vm111, %v57, 0
    %v122 = vsel %vm111, %v58, 0
    %v125 = vsel %vm111, %v59, 0
    %v128 = vsel %vm111, %v60, 0
    %v131 = vsel %vm111, %v61, 0
    %v134 = vsel %vm111, %v62, 0
    %v137 = vsel %vm111, %v39, 0
    %v140 = vsel %vm111, %v40, 0
    %v143 = vsel %vm111, %v41, 0
    %v146 = vsel %vm111, %v42, 0
    %v149 = vsel %vm111, %v43, 0
    %v152 = vsel %vm111, %v44, 0
    %v155 = vsel %vm111, %v45, 0
    %v158 = vsel %vm111, %v46, 0
    %v161 = vsel %vm111, %v47, 0
    %v164 = vsel %vm111, %v48, 0
    %v167 = vsel %vm111, %v49, 0
    %v170 = vsel %vm111, %v50, 0
    %v173 = vsel %vm111, %v51, 0
    %v176 = vsel %vm111, %v52, 0
    %v179 = vsel %vm111, %v53, 0
    %v182 = vsel %vm111, %v54, 0
    %184 = vmatprep.subr.mxu0 0.0
    %185 = vmatpush1.xpose.msra.mxu0 %v137
    %186 = vmatprep.subr.mxu0 0.0
    %187 = vmatpush1.xpose.msra.mxu0 %v140
    %188 = vmatprep.subr.mxu0 0.0
    %189 = vmatpush1.xpose.msra.mxu0 %v143
    %190 = vmatprep.subr.mxu0 0.0
    %191 = vmatpush1.xpose.msra.mxu0 %v146
    %192 = vmatprep.subr.mxu0 0.0
    %193 = vmatpush1.xpose.msra.mxu0 %v149
    %194 = vmatprep.subr.mxu0 0.0
    %195 = vmatpush1.xpose.msra.mxu0 %v152
    %196 = vmatprep.subr.mxu0 0.0
    %197 = vmatpush1.xpose.msra.mxu0 %v155
    %198 = vmatprep.subr.mxu0 0.0
    %199 = vmatpush1.xpose.msra.mxu0 %v158
    %200 = vmatprep.subr.mxu0 0.0
    %201 = vmatpush1.xpose.msra.mxu0 %v161
    %202 = vmatprep.subr.mxu0 0.0
    %203 = vmatpush1.xpose.msra.mxu0 %v164
    %204 = vmatprep.subr.mxu0 0.0
    %205 = vmatpush1.xpose.msra.mxu0 %v167
    %206 = vmatprep.subr.mxu0 0.0
    %207 = vmatpush1.xpose.msra.mxu0 %v170
    %208 = vmatprep.subr.mxu0 0.0
    %209 = vmatpush1.xpose.msra.mxu0 %v173
    %210 = vmatprep.subr.mxu0 0.0
    %211 = vmatpush1.xpose.msra.mxu0 %v176
    %212 = vmatprep.subr.mxu0 0.0
    %213 = vmatpush1.xpose.msra.mxu0 %v179
    %214 = vmatprep.subr.mxu0 0.0
    %215 = vmatpush1.xpose.msra.mxu0 %v182
    %216 = vmatprep.subr.mxu0 0.0
    %217 = vmatpush1.xpose.msra.mxu0 0.0
    %218 = vmatprep.subr.mxu0 0.0
    %219 = vmatpush1.xpose.msra.mxu0 0.0
    %220 = vmatprep.subr.mxu0 0.0
    %221 = vmatpush1.xpose.msra.mxu0 0.0
    %222 = vmatprep.subr.mxu0 0.0
    %223 = vmatpush1.xpose.msra.mxu0 0.0
    %224 = vmatprep.subr.mxu0 0.0
    %225 = vmatpush1.xpose.msra.mxu0 0.0
    %226 = vmatprep.subr.mxu0 0.0
    %227 = vmatpush1.xpose.msra.mxu0 0.0
    %228 = vmatprep.subr.mxu0 0.0
    %229 = vmatpush1.xpose.msra.mxu0 0.0
    %230 = vmatprep.subr.mxu0 0.0
    %231 = vmatpush1.xpose.msra.mxu0 0.0
    %232 = vmatprep.subr.mxu0 0.0
    %233 = vmatpush1.xpose.msra.mxu0 0.0
    %234 = vmatprep.subr.mxu0 0.0
    %235 = vmatpush1.xpose.msra.mxu0 0.0
    %236 = vmatprep.subr.mxu0 0.0
    %237 = vmatpush1.xpose.msra.mxu0 0.0
    %238 = vmatprep.subr.mxu0 0.0
    %239 = vmatpush1.xpose.msra.mxu0 0.0
    %240 = vmatprep.subr.mxu0 0.0
    %241 = vmatpush1.xpose.msra.mxu0 0.0
    %242 = vmatprep.subr.mxu0 0.0
    %243 = vmatpush1.xpose.msra.mxu0 0.0
    %244 = vmatprep.subr.mxu0 0.0
    %245 = vmatpush1.xpose.msra.mxu0 0.0
    %246 = vmatprep.subr.mxu0 0.0
    %247 = vmatpush1.xpose.msra.mxu0 0.0
    %248 = vmatprep.mubr.f32.mxu0 0.0
    %249 = vmatmul.mubr.f32.gmra.mrb[0].mxu0 %v113
    %v250 = vpop.f32.mrb[0].mxu0
    %v251 = vadd.f32 %v74, %v250
    %v252 = vpop.f32.mrb[0].mxu0
    %253 = vmatprep.mubr.f32.mxu0 0.0
    %254 = vmatmul.mubr.f32.gmra.mrb[0].mxu0 %v116
    %v255 = vpop.f32.mrb[0].mxu0
    %v256 = vadd.f32 %v79, %v255
    %v257 = vpop.f32.mrb[0].mxu0
    %258 = vmatprep.mubr.f32.mxu0 0.0
    %259 = vmatmul.mubr.f32.gmra.mrb[0].mxu0 %v119
    %v260 = vpop.f32.mrb[0].mxu0
    %v261 = vadd.f32 %v84, %v260
    %v262 = vpop.f32.mrb[0].mxu0
    %263 = vmatprep.mubr.f32.mxu0 0.0
    %264 = vmatmul.mubr.f32.gmra.mrb[0].mxu0 %v122
    %v265 = vpop.f32.mrb[0].mxu0
    %v266 = vadd.f32 %v89, %v265
    %v267 = vpop.f32.mrb[0].mxu0
    %268 = vmatprep.mubr.f32.mxu0 0.0
    %269 = vmatmul.mubr.f32.gmra.mrb[0].mxu0 %v125
    %v270 = vpop.f32.mrb[0].mxu0
    %v271 = vadd.f32 %v94, %v270
    %v272 = vpop.f32.mrb[0].mxu0
    %273 = vmatprep.mubr.f32.mxu0 0.0
    %274 = vmatmul.mubr.f32.gmra.mrb[0].mxu0 %v128
    %v275 = vpop.f32.mrb[0].mxu0
    %v276 = vadd.f32 %v99, %v275
    %v277 = vpop.f32.mrb[0].mxu0
    %278 = vmatprep.mubr.f32.mxu0 0.0
    %279 = vmatmul.mubr.f32.gmra.mrb[0].mxu0 %v131
    %v280 = vpop.f32.mrb[0].mxu0
    %v281 = vadd.f32 %v104, %v280
    %v282 = vpop.f32.mrb[0].mxu0
    %283 = vmatprep.mubr.f32.mxu0 0.0
    %284 = vmatmul.mubr.f32.gmra.mrb[0].mxu0 %v134
    %v285 = vpop.f32.mrb[0].mxu0
    %v286 = vadd.f32 %v109, %v285
    %v287 = vpop.f32.mrb[0].mxu0
    %288 = vdwg.mxu0
    %v289 = vmax.f32 %v251, 0.0
    %v290 = vmax.f32 %v256, 0.0
    %v291 = vmax.f32 %v261, 0.0
    %v292 = vmax.f32 %v266, 0.0
    %v293 = vmax.f32 %v271, 0.0
    %v294 = vmax.f32 %v276, 0.0
    %v295 = vmax.f32 %v281, 0.0
    %v296 = vmax.f32 %v286, 0.0
    %v297 = vld [vmem:[%s3] sm:$0xff]
    %v298 = vld [vmem:[%s3 + $0x8] sm:$0xff]
    %v299 = vld [vmem:[%s3 + $0x10] sm:$0xff]
    %v300 = vld [vmem:[%s3 + $0x18] sm:$0xff]
    %v301 = vld [vmem:[%s3 + $0x20] sm:$0xff]
    %v302 = vld [vmem:[%s3 + $0x28] sm:$0xff]
    %v303 = vld [vmem:[%s3 + $0x30] sm:$0xff]
    %v304 = vld [vmem:[%s3 + $0x38] sm:$0xff]
    %v305 = vld [vmem:[%s4] sm:$0xff]
    %v306 = vld [vmem:[%s4 + $0x8] sm:$0xff]
    %v307 = vld [vmem:[%s4 + $0x10] sm:$0xff]
    %v308 = vld [vmem:[%s4 + $0x18] sm:$0xff]
    %v309 = vld [vmem:[%s4 + $0x20] sm:$0xff]
    %v310 = vld [vmem:[%s4 + $0x28] sm:$0xff]
    %v311 = vld [vmem:[%s4 + $0x30] sm:$0xff]
    %v312 = vld [vmem:[%s4 + $0x38] sm:$0xff]
    %314 = vset.pattern.permute.xlu0 0
    %315 = vperm.xlu0 %314, %v305
    %v316 = vpop.permute.xlu0 %315
    %319 = vset.pattern.permute.xlu0 0
    %320 = vperm.xlu0 %319, %v306
    %v321 = vpop.permute.xlu0 %320
    %324 = vset.pattern.permute.xlu0 0
    %325 = vperm.xlu0 %324, %v307
    %v326 = vpop.permute.xlu0 %325
    %329 = vset.pattern.permute.xlu0 0
    %330 = vperm.xlu0 %329, %v308
    %v331 = vpop.permute.xlu0 %330
    %334 = vset.pattern.permute.xlu0 0
    %335 = vperm.xlu0 %334, %v309
    %v336 = vpop.permute.xlu0 %335
    %339 = vset.pattern.permute.xlu0 0
    %340 = vperm.xlu0 %339, %v310
    %v341 = vpop.permute.xlu0 %340
    %344 = vset.pattern.permute.xlu0 0
    %345 = vperm.xlu0 %344, %v311
    %v346 = vpop.permute.xlu0 %345
    %349 = vset.pattern.permute.xlu0 0
    %350 = vperm.xlu0 %349, %v312
    %v351 = vpop.permute.xlu0 %350
    %vm353 = vcmask 523264
    %v355 = vsel %vm353, %v297, 0
    %v358 = vsel %vm353, %v298, 0
    %v361 = vsel %vm353, %v299, 0
    %v364 = vsel %vm353, %v300, 0
    %v367 = vsel %vm353, %v301, 0
    %v370 = vsel %vm353, %v302, 0
    %v373 = vsel %vm353, %v303, 0
    %v376 = vsel %vm353, %v304, 0
    %378 = vmatprep.subr.mxu0 0.0
    %379 = vmatpush1.msra.mxu0 %v289
    %380 = vmatprep.subr.mxu0 0.0
    %381 = vmatpush1.msra.mxu0 %v290
    %382 = vmatprep.subr.mxu0 0.0
    %383 = vmatpush1.msra.mxu0 %v291
    %384 = vmatprep.subr.mxu0 0.0
    %385 = vmatpush1.msra.mxu0 %v292
    %386 = vmatprep.subr.mxu0 0.0
    %387 = vmatpush1.msra.mxu0 %v293
    %388 = vmatprep.subr.mxu0 0.0
    %389 = vmatpush1.msra.mxu0 %v294
    %390 = vmatprep.subr.mxu0 0.0
    %391 = vmatpush1.msra.mxu0 %v295
    %392 = vmatprep.subr.mxu0 0.0
    %393 = vmatpush1.msra.mxu0 %v296
    %394 = vmatprep.subr.mxu0 0.0
    %395 = vmatpush1.msra.mxu0 0.0
    %396 = vmatprep.subr.mxu0 0.0
    %397 = vmatpush1.msra.mxu0 0.0
    %398 = vmatprep.subr.mxu0 0.0
    %399 = vmatpush1.msra.mxu0 0.0
    %400 = vmatprep.subr.mxu0 0.0
    %401 = vmatpush1.msra.mxu0 0.0
    %402 = vmatprep.subr.mxu0 0.0
    %403 = vmatpush1.msra.mxu0 0.0
    %404 = vmatprep.subr.mxu0 0.0
    %405 = vmatpush1.msra.mxu0 0.0
    %406 = vmatprep.subr.mxu0 0.0
    %407 = vmatpush1.msra.mxu0 0.0
    %408 = vmatprep.subr.mxu0 0.0
    %409 = vmatpush1.msra.mxu0 0.0
    %410 = vmatprep.subr.mxu0 0.0
    %411 = vmatpush1.msra.mxu0 0.0
    %412 = vmatprep.subr.mxu0 0.0
    %413 = vmatpush1.msra.mxu0 0.0
    %414 = vmatprep.subr.mxu0 0.0
    %415 = vmatpush1.msra.mxu0 0.0
    %416 = vmatprep.subr.mxu0 0.0
    %417 = vmatpush1.msra.mxu0 0.0
    %418 = vmatprep.subr.mxu0 0.0
    %419 = vmatpush1.msra.mxu0 0.0
    %420 = vmatprep.subr.mxu0 0.0
    %421 = vmatpush1.msra.mxu0 0.0
    %422 = vmatprep.subr.mxu0 0.0
    %423 = vmatpush1.msra.mxu0 0.0
    %424 = vmatprep.subr.mxu0 0.0
    %425 = vmatpush1.msra.mxu0 0.0
    %426 = vmatprep.subr.mxu0 0.0
    %427 = vmatpush1.msra.mxu0 0.0
    %428 = vmatprep.subr.mxu0 0.0
    %429 = vmatpush1.msra.mxu0 0.0
    %430 = vmatprep.subr.mxu0 0.0
    %431 = vmatpush1.msra.mxu0 0.0
    %432 = vmatprep.subr.mxu0 0.0
    %433 = vmatpush1.msra.mxu0 0.0
    %434 = vmatprep.subr.mxu0 0.0
    %435 = vmatpush1.msra.mxu0 0.0
    %436 = vmatprep.subr.mxu0 0.0
    %437 = vmatpush1.msra.mxu0 0.0
    %438 = vmatprep.subr.mxu0 0.0
    %439 = vmatpush1.msra.mxu0 0.0
    %440 = vmatprep.subr.mxu0 0.0
    %441 = vmatpush1.msra.mxu0 0.0
    %442 = vmatprep.mubr.f32.mxu0 0.0
    %443 = vmatmul.mubr.f32.gmra.mrb[0].mxu0 %v355
    %v444 = vpop.f32.mrb[0].mxu0
    %v445 = vadd.f32 %v316, %v444
    %v446 = vpop.f32.mrb[0].mxu0
    %447 = vmatprep.mubr.f32.mxu0 0.0
    %448 = vmatmul.mubr.f32.gmra.mrb[0].mxu0 %v358
    %v449 = vpop.f32.mrb[0].mxu0
    %v450 = vadd.f32 %v321, %v449
    %v451 = vpop.f32.mrb[0].mxu0
    %452 = vmatprep.mubr.f32.mxu0 0.0
    %453 = vmatmul.mubr.f32.gmra.mrb[0].mxu0 %v361
    %v454 = vpop.f32.mrb[0].mxu0
    %v455 = vadd.f32 %v326, %v454
    %v456 = vpop.f32.mrb[0].mxu0
    %457 = vmatprep.mubr.f32.mxu0 0.0
    %458 = vmatmul.mubr.f32.gmra.mrb[0].mxu0 %v364
    %v459 = vpop.f32.mrb[0].mxu0
    %v460 = vadd.f32 %v331, %v459
    %v461 = vpop.f32.mrb[0].mxu0
    %462 = vmatprep.mubr.f32.mxu0 0.0
    %463 = vmatmul.mubr.f32.gmra.mrb[0].mxu0 %v367
    %v464 = vpop.f32.mrb[0].mxu0
    %v465 = vadd.f32 %v336, %v464
    %v466 = vpop.f32.mrb[0].mxu0
    %467 = vmatprep.mubr.f32.mxu0 0.0
    %468 = vmatmul.mubr.f32.gmra.mrb[0].mxu0 %v370
    %v469 = vpop.f32.mrb[0].mxu0
    %v470 = vadd.f32 %v341, %v469
    %v471 = vpop.f32.mrb[0].mxu0
    %472 = vmatprep.mubr.f32.mxu0 0.0
    %473 = vmatmul.mubr.f32.gmra.mrb[0].mxu0 %v373
    %v474 = vpop.f32.mrb[0].mxu0
    %v475 = vadd.f32 %v346, %v474
    %v476 = vpop.f32.mrb[0].mxu0
    %477 = vmatprep.mubr.f32.mxu0 0.0
    %478 = vmatmul.mubr.f32.gmra.mrb[0].mxu0 %v376
    %v479 = vpop.f32.mrb[0].mxu0
    %v480 = vadd.f32 %v351, %v479
    %v481 = vpop.f32.mrb[0].mxu0
    %482 = vdwg.mxu0
    %v483 = vmax.f32 %v445, 0.0
    %v484 = vmax.f32 %v450, 0.0
    %v485 = vmax.f32 %v455, 0.0
    %v486 = vmax.f32 %v460, 0.0
    %v487 = vmax.f32 %v465, 0.0
    %v488 = vmax.f32 %v470, 0.0
    %v489 = vmax.f32 %v475, 0.0
    %v490 = vmax.f32 %v480, 0.0
    %v491 = vld [vmem:[%s5] sm:$0xff]
    %v492 = vld [vmem:[%s5 + $0x8] sm:$0xff]
    %v493 = vld [vmem:[%s5 + $0x10] sm:$0xff]
    %v494 = vld [vmem:[%s5 + $0x18] sm:$0xff]
    %v495 = vld [vmem:[%s5 + $0x20] sm:$0xff]
    %v496 = vld [vmem:[%s5 + $0x28] sm:$0xff]
    %v497 = vld [vmem:[%s5 + $0x30] sm:$0xff]
    %v498 = vld [vmem:[%s5 + $0x38] sm:$0xff]
    %v499 = vld [vmem:[%s6] sm:$0xff]
    %v500 = vld [vmem:[%s6 + $0x8] sm:$0xff]
    %v501 = vld [vmem:[%s6 + $0x10] sm:$0xff]
    %v502 = vld [vmem:[%s6 + $0x18] sm:$0xff]
    %v503 = vld [vmem:[%s6 + $0x20] sm:$0xff]
    %v504 = vld [vmem:[%s6 + $0x28] sm:$0xff]
    %v505 = vld [vmem:[%s6 + $0x30] sm:$0xff]
    %v506 = vld [vmem:[%s6 + $0x38] sm:$0xff]
    %508 = vset.pattern.permute.xlu0 0
    %509 = vperm.xlu0 %508, %v499
    %v510 = vpop.permute.xlu0 %509
    %513 = vset.pattern.permute.xlu0 0
    %514 = vperm.xlu0 %513, %v500
    %v515 = vpop.permute.xlu0 %514
    %518 = vset.pattern.permute.xlu0 0
    %519 = vperm.xlu0 %518, %v501
    %v520 = vpop.permute.xlu0 %519
    %523 = vset.pattern.permute.xlu0 0
    %524 = vperm.xlu0 %523, %v502
    %v525 = vpop.permute.xlu0 %524
    %528 = vset.pattern.permute.xlu0 0
    %529 = vperm.xlu0 %528, %v503
    %v530 = vpop.permute.xlu0 %529
    %533 = vset.pattern.permute.xlu0 0
    %534 = vperm.xlu0 %533, %v504
    %v535 = vpop.permute.xlu0 %534
    %538 = vset.pattern.permute.xlu0 0
    %539 = vperm.xlu0 %538, %v505
    %v540 = vpop.permute.xlu0 %539
    %543 = vset.pattern.permute.xlu0 0
    %544 = vperm.xlu0 %543, %v506
    %v545 = vpop.permute.xlu0 %544
    %v548 = vsel %vm353, %v491, 0
    %v551 = vsel %vm353, %v492, 0
    %v554 = vsel %vm353, %v493, 0
    %v557 = vsel %vm353, %v494, 0
    %v560 = vsel %vm353, %v495, 0
    %v563 = vsel %vm353, %v496, 0
    %v566 = vsel %vm353, %v497, 0
    %v569 = vsel %vm353, %v498, 0
    %571 = vmatprep.subr.mxu0 0.0
    %572 = vmatpush1.msra.mxu0 %v483
    %573 = vmatprep.subr.mxu0 0.0
    %574 = vmatpush1.msra.mxu0 %v484
    %575 = vmatprep.subr.mxu0 0.0
    %576 = vmatpush1.msra.mxu0 %v485
    %577 = vmatprep.subr.mxu0 0.0
    %578 = vmatpush1.msra.mxu0 %v486
    %579 = vmatprep.subr.mxu0 0.0
    %580 = vmatpush1.msra.mxu0 %v487
    %581 = vmatprep.subr.mxu0 0.0
    %582 = vmatpush1.msra.mxu0 %v488
    %583 = vmatprep.subr.mxu0 0.0
    %584 = vmatpush1.msra.mxu0 %v489
    %585 = vmatprep.subr.mxu0 0.0
    %586 = vmatpush1.msra.mxu0 %v490
    %587 = vmatprep.subr.mxu0 0.0
    %588 = vmatpush1.msra.mxu0 0.0
    %589 = vmatprep.subr.mxu0 0.0
    %590 = vmatpush1.msra.mxu0 0.0
    %591 = vmatprep.subr.mxu0 0.0
    %592 = vmatpush1.msra.mxu0 0.0
    %593 = vmatprep.subr.mxu0 0.0
    %594 = vmatpush1.msra.mxu0 0.0
    %595 = vmatprep.subr.mxu0 0.0
    %596 = vmatpush1.msra.mxu0 0.0
    %597 = vmatprep.subr.mxu0 0.0
    %598 = vmatpush1.msra.mxu0 0.0
    %599 = vmatprep.subr.mxu0 0.0
    %600 = vmatpush1.msra.mxu0 0.0
    %601 = vmatprep.subr.mxu0 0.0
    %602 = vmatpush1.msra.mxu0 0.0
    %603 = vmatprep.subr.mxu0 0.0
    %604 = vmatpush1.msra.mxu0 0.0
    %605 = vmatprep.subr.mxu0 0.0
    %606 = vmatpush1.msra.mxu0 0.0
    %607 = vmatprep.subr.mxu0 0.0
    %608 = vmatpush1.msra.mxu0 0.0
    %609 = vmatprep.subr.mxu0 0.0
    %610 = vmatpush1.msra.mxu0 0.0
    %611 = vmatprep.subr.mxu0 0.0
    %612 = vmatpush1.msra.mxu0 0.0
    %613 = vmatprep.subr.mxu0 0.0
    %614 = vmatpush1.msra.mxu0 0.0
    %615 = vmatprep.subr.mxu0 0.0
    %616 = vmatpush1.msra.mxu0 0.0
    %617 = vmatprep.subr.mxu0 0.0
    %618 = vmatpush1.msra.mxu0 0.0
    %619 = vmatprep.subr.mxu0 0.0
    %620 = vmatpush1.msra.mxu0 0.0
    %621 = vmatprep.subr.mxu0 0.0
    %622 = vmatpush1.msra.mxu0 0.0
    %623 = vmatprep.subr.mxu0 0.0
    %624 = vmatpush1.msra.mxu0 0.0
    %625 = vmatprep.subr.mxu0 0.0
    %626 = vmatpush1.msra.mxu0 0.0
    %627 = vmatprep.subr.mxu0 0.0
    %628 = vmatpush1.msra.mxu0 0.0
    %629 = vmatprep.subr.mxu0 0.0
    %630 = vmatpush1.msra.mxu0 0.0
    %631 = vmatprep.subr.mxu0 0.0
    %632 = vmatpush1.msra.mxu0 0.0
    %633 = vmatprep.subr.mxu0 0.0
    %634 = vmatpush1.msra.mxu0 0.0
    %635 = vmatprep.mubr.f32.mxu0 0.0
    %636 = vmatmul.mubr.f32.gmra.mrb[0].mxu0 %v548
    %v637 = vpop.f32.mrb[0].mxu0
    %v638 = vadd.f32 %v510, %v637
    %v639 = vpop.f32.mrb[0].mxu0
    %640 = vmatprep.mubr.f32.mxu0 0.0
    %641 = vmatmul.mubr.f32.gmra.mrb[0].mxu0 %v551
    %v642 = vpop.f32.mrb[0].mxu0
    %v643 = vadd.f32 %v515, %v642
    %v644 = vpop.f32.mrb[0].mxu0
    %645 = vmatprep.mubr.f32.mxu0 0.0
    %646 = vmatmul.mubr.f32.gmra.mrb[0].mxu0 %v554
    %v647 = vpop.f32.mrb[0].mxu0
    %v648 = vadd.f32 %v520, %v647
    %v649 = vpop.f32.mrb[0].mxu0
    %650 = vmatprep.mubr.f32.mxu0 0.0
    %651 = vmatmul.mubr.f32.gmra.mrb[0].mxu0 %v557
    %v652 = vpop.f32.mrb[0].mxu0
    %v653 = vadd.f32 %v525, %v652
    %v654 = vpop.f32.mrb[0].mxu0
    %655 = vmatprep.mubr.f32.mxu0 0.0
    %656 = vmatmul.mubr.f32.gmra.mrb[0].mxu0 %v560
    %v657 = vpop.f32.mrb[0].mxu0
    %v658 = vadd.f32 %v530, %v657
    %v659 = vpop.f32.mrb[0].mxu0
    %660 = vmatprep.mubr.f32.mxu0 0.0
    %661 = vmatmul.mubr.f32.gmra.mrb[0].mxu0 %v563
    %v662 = vpop.f32.mrb[0].mxu0
    %v663 = vadd.f32 %v535, %v662
    %v664 = vpop.f32.mrb[0].mxu0
    %665 = vmatprep.mubr.f32.mxu0 0.0
    %666 = vmatmul.mubr.f32.gmra.mrb[0].mxu0 %v566
    %v667 = vpop.f32.mrb[0].mxu0
    %v668 = vadd.f32 %v540, %v667
    %v669 = vpop.f32.mrb[0].mxu0
    %670 = vmatprep.mubr.f32.mxu0 0.0
    %671 = vmatmul.mubr.f32.gmra.mrb[0].mxu0 %v569
    %v672 = vpop.f32.mrb[0].mxu0
    %v673 = vadd.f32 %v545, %v672
    %v674 = vpop.f32.mrb[0].mxu0
    %675 = vdwg.mxu0
    %v676 = vmax.f32 %v638, 0.0
    %v677 = vmax.f32 %v643, 0.0
    %v678 = vmax.f32 %v648, 0.0
    %v679 = vmax.f32 %v653, 0.0
    %v680 = vmax.f32 %v658, 0.0
    %v681 = vmax.f32 %v663, 0.0
    %v682 = vmax.f32 %v668, 0.0
    %v683 = vmax.f32 %v673, 0.0
    %v684 = vld [vmem:[%s7] sm:$0xff]
    %v685 = vld [vmem:[%s7 + $0x8] sm:$0xff]
    %v686 = vld [vmem:[%s7 + $0x10] sm:$0xff]
    %v687 = vld [vmem:[%s7 + $0x18] sm:$0xff]
    %v688 = vld [vmem:[%s7 + $0x20] sm:$0xff]
    %v689 = vld [vmem:[%s7 + $0x28] sm:$0xff]
    %v690 = vld [vmem:[%s7 + $0x30] sm:$0xff]
    %v691 = vld [vmem:[%s7 + $0x38] sm:$0xff]
    %v692 = vld [vmem:[%s8] sm:$0xff]
    %v693 = vld [vmem:[%s8 + $0x8] sm:$0xff]
    %v694 = vld [vmem:[%s8 + $0x10] sm:$0xff]
    %v695 = vld [vmem:[%s8 + $0x18] sm:$0xff]
    %v696 = vld [vmem:[%s8 + $0x20] sm:$0xff]
    %v697 = vld [vmem:[%s8 + $0x28] sm:$0xff]
    %v698 = vld [vmem:[%s8 + $0x30] sm:$0xff]
    %v699 = vld [vmem:[%s8 + $0x38] sm:$0xff]
    %701 = vset.pattern.permute.xlu0 0
    %702 = vperm.xlu0 %701, %v692
    %v703 = vpop.permute.xlu0 %702
    %706 = vset.pattern.permute.xlu0 0
    %707 = vperm.xlu0 %706, %v693
    %v708 = vpop.permute.xlu0 %707
    %711 = vset.pattern.permute.xlu0 0
    %712 = vperm.xlu0 %711, %v694
    %v713 = vpop.permute.xlu0 %712
    %716 = vset.pattern.permute.xlu0 0
    %717 = vperm.xlu0 %716, %v695
    %v718 = vpop.permute.xlu0 %717
    %721 = vset.pattern.permute.xlu0 0
    %722 = vperm.xlu0 %721, %v696
    %v723 = vpop.permute.xlu0 %722
    %726 = vset.pattern.permute.xlu0 0
    %727 = vperm.xlu0 %726, %v697
    %v728 = vpop.permute.xlu0 %727
    %731 = vset.pattern.permute.xlu0 0
    %732 = vperm.xlu0 %731, %v698
    %v733 = vpop.permute.xlu0 %732
    %736 = vset.pattern.permute.xlu0 0
    %737 = vperm.xlu0 %736, %v699
    %v738 = vpop.permute.xlu0 %737
    %v741 = vsel %vm353, %v684, 0
    %v744 = vsel %vm353, %v685, 0
    %v747 = vsel %vm353, %v686, 0
    %v750 = vsel %vm353, %v687, 0
    %v753 = vsel %vm353, %v688, 0
    %v756 = vsel %vm353, %v689, 0
    %v759 = vsel %vm353, %v690, 0
    %v762 = vsel %vm353, %v691, 0
    %764 = vmatprep.subr.mxu0 0.0
    %765 = vmatpush1.msra.mxu0 %v676
    %766 = vmatprep.subr.mxu0 0.0
    %767 = vmatpush1.msra.mxu0 %v677
    %768 = vmatprep.subr.mxu0 0.0
    %769 = vmatpush1.msra.mxu0 %v678
    %770 = vmatprep.subr.mxu0 0.0
    %771 = vmatpush1.msra.mxu0 %v679
    %772 = vmatprep.subr.mxu0 0.0
    %773 = vmatpush1.msra.mxu0 %v680
    %774 = vmatprep.subr.mxu0 0.0
    %775 = vmatpush1.msra.mxu0 %v681
    %776 = vmatprep.subr.mxu0 0.0
    %777 = vmatpush1.msra.mxu0 %v682
    %778 = vmatprep.subr.mxu0 0.0
    %779 = vmatpush1.msra.mxu0 %v683
    %780 = vmatprep.subr.mxu0 0.0
    %781 = vmatpush1.msra.mxu0 0.0
    %782 = vmatprep.subr.mxu0 0.0
    %783 = vmatpush1.msra.mxu0 0.0
    %784 = vmatprep.subr.mxu0 0.0
    %785 = vmatpush1.msra.mxu0 0.0
    %786 = vmatprep.subr.mxu0 0.0
    %787 = vmatpush1.msra.mxu0 0.0
    %788 = vmatprep.subr.mxu0 0.0
    %789 = vmatpush1.msra.mxu0 0.0
    %790 = vmatprep.subr.mxu0 0.0
    %791 = vmatpush1.msra.mxu0 0.0
    %792 = vmatprep.subr.mxu0 0.0
    %793 = vmatpush1.msra.mxu0 0.0
    %794 = vmatprep.subr.mxu0 0.0
    %795 = vmatpush1.msra.mxu0 0.0
    %796 = vmatprep.subr.mxu0 0.0
    %797 = vmatpush1.msra.mxu0 0.0
    %798 = vmatprep.subr.mxu0 0.0
    %799 = vmatpush1.msra.mxu0 0.0
    %800 = vmatprep.subr.mxu0 0.0
    %801 = vmatpush1.msra.mxu0 0.0
    %802 = vmatprep.subr.mxu0 0.0
    %803 = vmatpush1.msra.mxu0 0.0
    %804 = vmatprep.subr.mxu0 0.0
    %805 = vmatpush1.msra.mxu0 0.0
    %806 = vmatprep.subr.mxu0 0.0
    %807 = vmatpush1.msra.mxu0 0.0
    %808 = vmatprep.subr.mxu0 0.0
    %809 = vmatpush1.msra.mxu0 0.0
    %810 = vmatprep.subr.mxu0 0.0
    %811 = vmatpush1.msra.mxu0 0.0
    %812 = vmatprep.subr.mxu0 0.0
    %813 = vmatpush1.msra.mxu0 0.0
    %814 = vmatprep.subr.mxu0 0.0
    %815 = vmatpush1.msra.mxu0 0.0
    %816 = vmatprep.subr.mxu0 0.0
    %817 = vmatpush1.msra.mxu0 0.0
    %818 = vmatprep.subr.mxu0 0.0
    %819 = vmatpush1.msra.mxu0 0.0
    %820 = vmatprep.subr.mxu0 0.0
    %821 = vmatpush1.msra.mxu0 0.0
    %822 = vmatprep.subr.mxu0 0.0
    %823 = vmatpush1.msra.mxu0 0.0
    %824 = vmatprep.subr.mxu0 0.0
    %825 = vmatpush1.msra.mxu0 0.0
    %826 = vmatprep.subr.mxu0 0.0
    %827 = vmatpush1.msra.mxu0 0.0
    %828 = vmatprep.mubr.f32.mxu0 0.0
    %829 = vmatmul.mubr.f32.gmra.mrb[0].mxu0 %v741
    %v830 = vpop.f32.mrb[0].mxu0
    %v831 = vadd.f32 %v703, %v830
    %v832 = vpop.f32.mrb[0].mxu0
    %833 = vmatprep.mubr.f32.mxu0 0.0
    %834 = vmatmul.mubr.f32.gmra.mrb[0].mxu0 %v744
    %v835 = vpop.f32.mrb[0].mxu0
    %v836 = vadd.f32 %v708, %v835
    %v837 = vpop.f32.mrb[0].mxu0
    %838 = vmatprep.mubr.f32.mxu0 0.0
    %839 = vmatmul.mubr.f32.gmra.mrb[0].mxu0 %v747
    %v840 = vpop.f32.mrb[0].mxu0
    %v841 = vadd.f32 %v713, %v840
    %v842 = vpop.f32.mrb[0].mxu0
    %843 = vmatprep.mubr.f32.mxu0 0.0
    %844 = vmatmul.mubr.f32.gmra.mrb[0].mxu0 %v750
    %v845 = vpop.f32.mrb[0].mxu0
    %v846 = vadd.f32 %v718, %v845
    %v847 = vpop.f32.mrb[0].mxu0
    %848 = vmatprep.mubr.f32.mxu0 0.0
    %849 = vmatmul.mubr.f32.gmra.mrb[0].mxu0 %v753
    %v850 = vpop.f32.mrb[0].mxu0
    %v851 = vadd.f32 %v723, %v850
    %v852 = vpop.f32.mrb[0].mxu0
    %853 = vmatprep.mubr.f32.mxu0 0.0
    %854 = vmatmul.mubr.f32.gmra.mrb[0].mxu0 %v756
    %v855 = vpop.f32.mrb[0].mxu0
    %v856 = vadd.f32 %v728, %v855
    %v857 = vpop.f32.mrb[0].mxu0
    %858 = vmatprep.mubr.f32.mxu0 0.0
    %859 = vmatmul.mubr.f32.gmra.mrb[0].mxu0 %v759
    %v860 = vpop.f32.mrb[0].mxu0
    %v861 = vadd.f32 %v733, %v860
    %v862 = vpop.f32.mrb[0].mxu0
    %863 = vmatprep.mubr.f32.mxu0 0.0
    %864 = vmatmul.mubr.f32.gmra.mrb[0].mxu0 %v762
    %v865 = vpop.f32.mrb[0].mxu0
    %v866 = vadd.f32 %v738, %v865
    %v867 = vpop.f32.mrb[0].mxu0
    %868 = vdwg.mxu0
    %v869 = vmax.f32 %v831, 0.0
    %v870 = vmax.f32 %v836, 0.0
    %v871 = vmax.f32 %v841, 0.0
    %v872 = vmax.f32 %v846, 0.0
    %v873 = vmax.f32 %v851, 0.0
    %v874 = vmax.f32 %v856, 0.0
    %v875 = vmax.f32 %v861, 0.0
    %v876 = vmax.f32 %v866, 0.0
    %v877 = vld [vmem:[%s9] sm:$0x3]
    %v878 = vld [vmem:[%s10] sm:$0x3]
    %880 = vset.pattern.permute.xlu0 0
    %881 = vperm.xlu0 %880, %v878
    %v882 = vpop.permute.xlu0 %881
    %v885 = vsel %vm353, %v877, 0
    %887 = vmatprep.subr.mxu0 0.0
    %888 = vmatpush1.msra.mxu0 %v869
    %889 = vmatprep.subr.mxu0 0.0
    %890 = vmatpush1.msra.mxu0 %v870
    %891 = vmatprep.subr.mxu0 0.0
    %892 = vmatpush1.msra.mxu0 %v871
    %893 = vmatprep.subr.mxu0 0.0
    %894 = vmatpush1.msra.mxu0 %v872
    %895 = vmatprep.subr.mxu0 0.0
    %896 = vmatpush1.msra.mxu0 %v873
    %897 = vmatprep.subr.mxu0 0.0
    %898 = vmatpush1.msra.mxu0 %v874
    %899 = vmatprep.subr.mxu0 0.0
    %900 = vmatpush1.msra.mxu0 %v875
    %901 = vmatprep.subr.mxu0 0.0
    %902 = vmatpush1.msra.mxu0 %v876
    %903 = vmatprep.subr.mxu0 0.0
    %904 = vmatpush1.msra.mxu0 0.0
    %905 = vmatprep.subr.mxu0 0.0
    %906 = vmatpush1.msra.mxu0 0.0
    %907 = vmatprep.subr.mxu0 0.0
    %908 = vmatpush1.msra.mxu0 0.0
    %909 = vmatprep.subr.mxu0 0.0
    %910 = vmatpush1.msra.mxu0 0.0
    %911 = vmatprep.subr.mxu0 0.0
    %912 = vmatpush1.msra.mxu0 0.0
    %913 = vmatprep.subr.mxu0 0.0
    %914 = vmatpush1.msra.mxu0 0.0
    %915 = vmatprep.subr.mxu0 0.0
    %916 = vmatpush1.msra.mxu0 0.0
    %917 = vmatprep.subr.mxu0 0.0
    %918 = vmatpush1.msra.mxu0 0.0
    %919 = vmatprep.subr.mxu0 0.0
    %920 = vmatpush1.msra.mxu0 0.0
    %921 = vmatprep.subr.mxu0 0.0
    %922 = vmatpush1.msra.mxu0 0.0
    %923 = vmatprep.subr.mxu0 0.0
    %924 = vmatpush1.msra.mxu0 0.0
    %925 = vmatprep.subr.mxu0 0.0
    %926 = vmatpush1.msra.mxu0 0.0
    %927 = vmatprep.subr.mxu0 0.0
    %928 = vmatpush1.msra.mxu0 0.0
    %929 = vmatprep.subr.mxu0 0.0
    %930 = vmatpush1.msra.mxu0 0.0
    %931 = vmatprep.subr.mxu0 0.0
    %932 = vmatpush1.msra.mxu0 0.0
    %933 = vmatprep.subr.mxu0 0.0
    %934 = vmatpush1.msra.mxu0 0.0
    %935 = vmatprep.subr.mxu0 0.0
    %936 = vmatpush1.msra.mxu0 0.0
    %937 = vmatprep.subr.mxu0 0.0
    %938 = vmatpush1.msra.mxu0 0.0
    %939 = vmatprep.subr.mxu0 0.0
    %940 = vmatpush1.msra.mxu0 0.0
    %941 = vmatprep.subr.mxu0 0.0
    %942 = vmatpush1.msra.mxu0 0.0
    %943 = vmatprep.subr.mxu0 0.0
    %944 = vmatpush1.msra.mxu0 0.0
    %945 = vmatprep.subr.mxu0 0.0
    %946 = vmatpush1.msra.mxu0 0.0
    %947 = vmatprep.subr.mxu0 0.0
    %948 = vmatpush1.msra.mxu0 0.0
    %949 = vmatprep.subr.mxu0 0.0
    %950 = vmatpush1.msra.mxu0 0.0
    %951 = vmatprep.mubr.f32.mxu0 0.0
    %952 = vmatmul.mubr.f32.gmra.mrb[0].mxu0 %v885
    %v953 = vpop.f32.mrb[0].mxu0
    %v954 = vadd.f32 %v882, %v953
    %v955 = vpop.f32.mrb[0].mxu0
    %956 = vdwg.mxu0
    %957 = vst [vmem:[#allocation2] sm:$0x3] %v954
    // Predicated region
    $region46: #{tpu_custom_call.1} parent=1 // pred_check
      _
    $region47: #{tpu_custom_call.1} parent=1 // pred_check_branch
      %959 = sbr.rel (0) target = $region49
    $region48: #{tpu_custom_call.1} parent=1 // pred_region
      %s961 = ssub.s32 32, 32
      %962 = vsyncadd [#allocation3], %s961
      %s964 = sshll.u32 [#allocation2], 4
      %s965 = int_to_ptr.vmem [resolvable:$true] %s964
      %967 = dma.vmem_to_hbm [thread:$0]  %s965, 32, %s11, [#allocation3]
    $region49: #{tpu_custom_call.1} parent=1 // pred_fallthru
      _
    // Predicated region
    $region50: #{tpu_custom_call.1} parent=1 // pred_check
      _
    $region51: #{tpu_custom_call.1} parent=1 // pred_check_branch
      %969 = sbr.rel (0) target = $region53
    $region52: #{tpu_custom_call.1} parent=1 // pred_region
      %970 = dma.done [#allocation3], 32
    $region53: #{tpu_custom_call.1} parent=1 // pred_fallthru
      _
    %971 = vsyncpa [#allocation3], 1

</llo_original>
